<compile_context>
chip_gen: v6e
topology: v6e:2x2x1
jax: 0.10.0
libtpu: 0.0.40
codegen_flags: <defaults>
</compile_context>

<pallas_src>
import jax
import jax.numpy as jnp
from jax.experimental import pallas as pl
from jax.experimental.pallas import tpu as pltpu


# --------------------------------------------------------------------------- #
# Helpers
# --------------------------------------------------------------------------- #
def _round_up(x, m):
    return ((x + m - 1) // m) * m


def _cdiv(a, b):
    return -(-a // b)


def _sublane(dtype):
    # Min sublane height of a tile in this dtype: f32 -> 8, bf16 -> 16, 8-bit -> 32.
    return max(8, 32 // jnp.dtype(dtype).itemsize)


def _tile(dim, preferred, align):
    """Pick (tile, padded_dim).

    `tile` is a multiple of `align`, at most ~`preferred`, and divides
    `padded_dim` exactly.  Instead of shrinking the tile to an awkward divisor
    of the padded dim (sub-MXU tiles, sublane relayouts), we keep near-uniform
    aligned tiles and pad a few extra zero rows/lanes.
    """
    pdim = _round_up(dim, align)
    preferred = max((preferred // align) * align, align)
    if pdim <= preferred:
        return pdim, pdim
    n_tiles = _cdiv(pdim, preferred)
    t = _round_up(_cdiv(pdim, n_tiles), align)
    return t, t * n_tiles


def _vmem_budget_bytes():
    """Generation-aware scoped-VMEM budget (never the full physical VMEM)."""
    try:
        cap = int(pltpu.get_tpu_info().vmem_capacity_bytes)
    except Exception:  # pragma: no cover - interpret mode / older runtimes
        cap = 128 * 1024 * 1024
    # ~96 MiB on v5e/v6e (128 MiB physical), ~48 MiB on v7x (64 MiB physical):
    # leaves headroom for Mosaic internal scratch.
    return (cap * 3) // 4


# --------------------------------------------------------------------------- #
# Kernels
# --------------------------------------------------------------------------- #
def _head_mm_kernel_accout(x_ref, w_ref, b_ref, o_ref):
    """y = x @ w + b.  o_ref is f32 and revisited across the K axis, so it is
    used directly as the accumulator (no scratch, no epilogue copy)."""
    k = pl.program_id(3)

    @pl.when(k == 0)
    def _init():
        # Seed the accumulator with the bias (f32) — avoids a separate epilogue.
        o_ref[...] = jnp.zeros_like(o_ref) + b_ref[...]

    # x is DMA'd in its storage dtype and cast to the (pre-cast) weight dtype
    # right before the MXU; the cast hides under the MXU slot.
    o_ref[...] += jnp.dot(x_ref[...].astype(w_ref.dtype), w_ref[...],
                          preferred_element_type=jnp.float32)


def _head_mm_kernel_scratch(x_ref, w_ref, b_ref, o_ref, acc_ref):
    """Same as above for non-f32 outputs: f32 scratch accumulator + cast on the
    last K step."""
    k = pl.program_id(3)

    @pl.when(k == 0)
    def _init():
        acc_ref[...] = jnp.zeros_like(acc_ref) + b_ref[...]

    acc_ref[...] += jnp.dot(x_ref[...].astype(w_ref.dtype), w_ref[...],
                            preferred_element_type=jnp.float32)

    @pl.when(k == pl.num_programs(3) - 1)
    def _store():
        o_ref[...] = acc_ref[...].astype(o_ref.dtype)


# --------------------------------------------------------------------------- #
# Parameter prep (one-time) + forward
# --------------------------------------------------------------------------- #
def prepare_flatten_head(weight, bias, *, individual, n_vars,
                         compute_dtype=None, tn=512, tk=1024):
    """One-time parameter prep.

    weight: shared  -> (nf, target_window)            (W^T of nn.Linear)
            per-var -> (n_vars, nf, target_window)
    bias:   shared  -> (target_window,)
            per-var -> (n_vars, target_window)

    Pads K/N to lane multiples, casts the weight to the MXU feed dtype
    (bf16 recommended on all generations — v5e's MXU is bf16-native and this
    halves the dominant weight-HBM stream), keeps bias in f32.
    """
    if individual:
        g, nf, tw = weight.shape
        assert g == n_vars
        w_g = weight
        b_g = bias.reshape(n_vars, 1, tw)
    else:
        nf, tw = weight.shape
        w_g = weight.reshape(1, nf, tw)
        b_g = bias.reshape(1, 1, tw)

    TN, Np = _tile(tw, tn, 128)
    TK, Kp = _tile(nf, tk, 128)

    if Kp != nf or Np != tw:
        w_g = jnp.pad(w_g, ((0, 0), (0, Kp - nf), (0, Np - tw)))
    if Np != tw:
        b_g = jnp.pad(b_g, ((0, 0), (0, 0), (0, Np - tw)))
    if compute_dtype is not None:
        w_g = w_g.astype(compute_dtype)
    b_g = b_g.astype(jnp.float32)  # bias only touched in the f32 init/epilogue

    return dict(w=w_g, b=b_g, nf=nf, tw=tw, TK=TK, TN=TN,
                individual=bool(individual), n_vars=int(n_vars))


def _batched_linear(x_g, w_g, b_g, *, tw, TK, TN, tm=512):
    """y[g] = x[g] @ w[g] + b[g].

    x_g: (G, rows, nf) unpadded; w_g: (G, Kp, Np) pre-padded/cast;
    b_g: (G, 1, Np) f32.  Returns (G, rows, tw) in x's dtype.
    """
    G, rows, nf = x_g.shape
    _, Kp, Np = w_g.shape
    out_dtype = jnp.dtype(x_g.dtype)

    # Sublane alignment follows the activation/output storage dtype.
    sub = _sublane(out_dtype)
    TM, Mp = _tile(rows, tm, sub)

    # Only the K tail is semantically required to be zero; the M tail is a few
    # zero rows so the grid divides evenly.  Both are no-ops when aligned.
    if Mp != rows or Kp != nf:
        x_g = jnp.pad(x_g, ((0, 0), (0, Mp - rows), (0, Kp - nf)))

    gm, gn, gk = Mp // TM, Np // TN, Kp // TK

    # v7x has 2 TensorCores sharded over the parallel grid axes: if the
    # parallel product is 1, split the N tile so both cores get work (costs
    # ~one extra grid step on single-TC generations).
    if G * gm * gn == 1 and Np >= 256:
        for d in range((TN // 2 // 128) * 128, 127, -128):
            if Np % d == 0:
                TN = d
                gn = Np // TN
                break

    grid = (G, gm, gn, gk)

    xi = jnp.dtype(x_g.dtype).itemsize
    wi = jnp.dtype(w_g.dtype).itemsize
    oi = out_dtype.itemsize
    acc_into_out = out_dtype == jnp.dtype(jnp.float32)

    # Double-buffered input/output blocks (+ f32 scratch on the non-f32 path).
    block_bytes = 2 * (TM * TK * xi + TK * TN * wi + TN * 4 + TM * TN * oi)
    if not acc_into_out:
        block_bytes += TM * TN * 4
    budget = _vmem_budget_bytes()
    vmem_limit = int(min(max(2 * block_bytes, 32 * 1024 * 1024), budget))

    cost = pl.CostEstimate(
        flops=2 * G * Mp * Kp * Np,
        transcendentals=0,
        bytes_accessed=int(x_g.size * xi + w_g.size * wi + b_g.size * 4
                           + G * Mp * Np * oi),
    )

    kernel = _head_mm_kernel_accout if acc_into_out else _head_mm_kernel_scratch
    scratch = [] if acc_into_out else [pltpu.VMEM((TM, TN), jnp.float32)]

    y = pl.pallas_call(
        kernel,
        out_shape=jax.ShapeDtypeStruct((G, Mp, Np), out_dtype),
        grid_spec=pltpu.PrefetchScalarGridSpec(
            num_scalar_prefetch=0,
            grid=grid,
            in_specs=[
                pl.BlockSpec((pl.Squeezed(), TM, TK),
                             lambda g, i, j, k: (g, i, k)),
                pl.BlockSpec((pl.Squeezed(), TK, TN),
                             lambda g, i, j, k: (g, k, j)),
                pl.BlockSpec((pl.Squeezed(), 1, TN),
                             lambda g, i, j, k: (g, 0, j)),
            ],
            out_specs=pl.BlockSpec((pl.Squeezed(), TM, TN),
                                   lambda g, i, j, k: (g, i, j)),
            scratch_shapes=scratch,
        ),
        compiler_params=pltpu.CompilerParams(
            dimension_semantics=("parallel", "parallel", "parallel",
                                 "arbitrary"),
            vmem_limit_bytes=vmem_limit,
        ),
        cost_estimate=cost,
    )(x_g, w_g, b_g)

    if Mp != rows or Np != tw:
        y = y[:, :rows, :tw]
    return y


def flatten_head_forward(x, params, *, tm=512):
    """Pallas Flatten_Head forward.

    x: (B, n_vars, d_model, patch_num) -> (B, n_vars, target_window)
    params: output of prepare_flatten_head (one-time weight/bias prep).
    """
    n_vars = params["n_vars"]
    tw = params["tw"]
    B = x.shape[0]
    nf = x.shape[-1] * x.shape[-2]
    assert nf == params["nf"]
    # torch.reshape(..., (-1, n_vars, last, second_last)) + Flatten(-2) is a
    # pure reinterpretation of the last two dims (no data movement).
    x_flat = x.reshape(B, n_vars, nf)

    if params["individual"]:
        # Per-variable heads: group axis leading keeps the last two block dims
        # sublane/lane dense.  MSDMixer always builds individual=False heads,
        # so this transpose pair is off the hot path.
        x_g = jnp.transpose(x_flat, (1, 0, 2))                 # (n_vars, B, nf)
        y = _batched_linear(x_g, params["w"], params["b"], tw=tw,
                            TK=params["TK"], TN=params["TN"], tm=tm)
        return jnp.transpose(y, (1, 0, 2))                     # (B, n_vars, tw)

    x_g = x_flat.reshape(1, B * n_vars, nf)                    # free reshape
    y = _batched_linear(x_g, params["w"], params["b"], tw=tw,
                        TK=params["TK"], TN=params["TN"], tm=tm)
    return y.reshape(B, n_vars, tw)


def _ref_forward(x, weight, bias, *, individual, n_vars):
    B = x.shape[0]
    nf = x.shape[-1] * x.shape[-2]
    xf = x.reshape(B, n_vars, nf)
    if individual:
        return jnp.einsum("bvn,vnt->bvt", xf, weight) + bias[None, :, :]
    return xf @ weight + bias


if __name__ == "__main__":
    # Small shapes consistent with the module: nf = d_model * patch_num.
    B, n_vars, d_model, patch_num = 2, 4, 32, 8
    nf = d_model * patch_num            # 256
    target_window = 128

    key = jax.random.PRNGKey(0)
    kx, kw0, kb0, kw1, kb1 = jax.random.split(key, 5)

    x = jax.random.normal(kx, (B, n_vars, d_model, patch_num), jnp.float32)

    # nn.Linear-style deterministic init: uniform in [-1/sqrt(nf), 1/sqrt(nf)].
    bound = 1.0 / jnp.sqrt(jnp.float32(nf))
    w_shared = jax.random.uniform(kw0, (nf, target_window), jnp.float32,
                                  -bound, bound)
    b_shared = jax.random.uniform(kb0, (target_window,), jnp.float32,
                                  -bound, bound)
    w_indiv = jax.random.uniform(kw1, (n_vars, nf, target_window), jnp.float32,
                                 -bound, bound)
    b_indiv = jax.random.uniform(kb1, (n_vars, target_window), jnp.float32,
                                 -bound, bound)

    # 1) individual=False (the configuration MSDMixer actually uses), f32,
    #    accumulate-directly-into-output path.
    p0 = prepare_flatten_head(w_shared, b_shared, individual=False,
                              n_vars=n_vars)
    y0 = jax.block_until_ready(flatten_head_forward(x, p0))
    r0 = _ref_forward(x, w_shared, b_shared, individual=False, n_vars=n_vars)
    assert y0.shape == (B, n_vars, target_window)
    assert jnp.allclose(y0, r0, rtol=1e-5, atol=1e-5)

    # 2) individual=True (per-variable heads), f32.
    p1 = prepare_flatten_head(w_indiv, b_indiv, individual=True,
                              n_vars=n_vars)
    y1 = jax.block_until_ready(flatten_head_forward(x, p1))
    r1 = _ref_forward(x, w_indiv, b_indiv, individual=True, n_vars=n_vars)
    assert y1.shape == (B, n_vars, target_window)
    assert jnp.allclose(y1, r1, rtol=1e-5, atol=1e-5)

    # 3) bf16 MXU feed (valid on v5e/v6e/v7x): weight pre-cast once at prep,
    #    f32 x cast in-kernel, f32 accumulation & output.
    p2 = prepare_flatten_head(w_shared, b_shared, individual=False,
                              n_vars=n_vars, compute_dtype=jnp.bfloat16)
    y2 = jax.block_until_ready(flatten_head_forward(x, p2))
    assert y2.shape == (B, n_vars, target_window)
    assert jnp.allclose(y2, r0, rtol=5e-2, atol=5e-2)

    # 4) bf16 activations + bf16 weights -> bf16 output (f32-scratch path,
    #    16-sublane tiles).
    xb = x.astype(jnp.bfloat16)
    y3 = jax.block_until_ready(flatten_head_forward(xb, p2))
    assert y3.shape == (B, n_vars, target_window)
    assert jnp.allclose(y3.astype(jnp.float32), r0, rtol=1e-1, atol=1e-1)

    print("KERNEL_OK")
</pallas_src>

<mosaic_0001>
module attributes {stable_mosaic.version = 11 : i64} {
  func.func @_head_mm_kernel_accout(%arg0: i32, %arg1: i32, %arg2: i32, %arg3: i32, %arg4: memref<1x8x256xf32, #tpu.memory_space<vmem>>, %arg5: memref<1x256x128xf32, #tpu.memory_space<vmem>>, %arg6: memref<1x1x128xf32, #tpu.memory_space<vmem>>, %arg7: memref<1x8x128xf32, #tpu.memory_space<vmem>>) attributes {dimension_semantics = [#tpu.dimension_semantics<parallel>, #tpu.dimension_semantics<parallel>, #tpu.dimension_semantics<parallel>, #tpu.dimension_semantics<arbitrary>], iteration_bounds = array<i64: 1, 1, 1, 1>, scalar_prefetch = 0 : i64, scratch_operands = 0 : i64, tpu.core_type = #tpu.core_type<tc>, window_params = [{transform_indices = @transform_0, window_bounds = array<i64: 1, 8, 256>}, {transform_indices = @transform_1, window_bounds = array<i64: 1, 256, 128>}, {transform_indices = @transform_2, window_bounds = array<i64: 1, 1, 128>}, {transform_indices = @transform_3, window_bounds = array<i64: 1, 8, 128>}]} {
    %c0_i32 = arith.constant 0 : i32
    %0 = arith.cmpi eq, %arg3, %c0_i32 : i32
    %1 = arith.extui %0 : i1 to i32
    %c0_i32_0 = arith.constant 0 : i32
    %2 = arith.cmpi ne, %1, %c0_i32_0 : i32
    scf.if %2 {
      %cst_12 = arith.constant 0.000000e+00 : f32
      %14 = vector.broadcast %cst_12 : f32 to vector<8x128xf32>
      %c0_13 = arith.constant 0 : index
      %c0_14 = arith.constant 0 : index
      %c0_15 = arith.constant 0 : index
      %15 = vector.load %arg6[%c0_13, %c0_14, %c0_15] : memref<1x1x128xf32, #tpu.memory_space<vmem>>, vector<1x1x128xf32>
      %16 = vector.shape_cast %15 : vector<1x1x128xf32> to vector<1x128xf32>
      %17 = vector.broadcast %16 : vector<1x128xf32> to vector<8x128xf32>
      %18 = arith.addf %14, %17 : vector<8x128xf32>
      %c0_16 = arith.constant 0 : index
      %c0_17 = arith.constant 0 : index
      %c0_18 = arith.constant 0 : index
      %19 = vector.load %arg7[%c0_16, %c0_17, %c0_18] : memref<1x8x128xf32, #tpu.memory_space<vmem>>, vector<1x8x128xf32>
      %20 = vector.shape_cast %19 : vector<1x8x128xf32> to vector<8x128xf32>
      %21 = vector.shape_cast %18 : vector<8x128xf32> to vector<1x8x128xf32>
      tpu.vector_store %arg7[%c0_16, %c0_17, %c0_18], %21 {strides = array<i32>} : memref<1x8x128xf32, #tpu.memory_space<vmem>>, vector<1x8x128xf32>,
    } else {
    }
    %c0 = arith.constant 0 : index
    %c0_1 = arith.constant 0 : index
    %c0_2 = arith.constant 0 : index
    %3 = vector.load %arg7[%c0, %c0_1, %c0_2] : memref<1x8x128xf32, #tpu.memory_space<vmem>>, vector<1x8x128xf32>
    %4 = vector.shape_cast %3 : vector<1x8x128xf32> to vector<8x128xf32>
    %c0_3 = arith.constant 0 : index
    %c0_4 = arith.constant 0 : index
    %c0_5 = arith.constant 0 : index
    %5 = vector.load %arg4[%c0_3, %c0_4, %c0_5] : memref<1x8x256xf32, #tpu.memory_space<vmem>>, vector<1x8x256xf32>
    %6 = vector.shape_cast %5 : vector<1x8x256xf32> to vector<8x256xf32>
    %c0_6 = arith.constant 0 : index
    %c0_7 = arith.constant 0 : index
    %c0_8 = arith.constant 0 : index
    %7 = vector.load %arg5[%c0_6, %c0_7, %c0_8] : memref<1x256x128xf32, #tpu.memory_space<vmem>>, vector<1x256x128xf32>
    %8 = vector.shape_cast %7 : vector<1x256x128xf32> to vector<256x128xf32>
    %cst = arith.constant dense<0.000000e+00> : vector<8x128xf32>
    %9 = tpu.matmul %6, %8, %cst {dimension_numbers = #tpu.dot_dimension_numbers<[1], [0], [0], [1], [0, 0, 1, 1], [], []>} : vector<8x256xf32>, vector<256x128xf32>, vector<8x128xf32> -> vector<8x128xf32>
    %10 = arith.addf %4, %9 : vector<8x128xf32>
    %c0_9 = arith.constant 0 : index
    %c0_10 = arith.constant 0 : index
    %c0_11 = arith.constant 0 : index
    %11 = vector.load %arg7[%c0_9, %c0_10, %c0_11] : memref<1x8x128xf32, #tpu.memory_space<vmem>>, vector<1x8x128xf32>
    %12 = vector.shape_cast %11 : vector<1x8x128xf32> to vector<8x128xf32>
    %13 = vector.shape_cast %10 : vector<8x128xf32> to vector<1x8x128xf32>
    tpu.vector_store %arg7[%c0_9, %c0_10, %c0_11], %13 {strides = array<i32>} : memref<1x8x128xf32, #tpu.memory_space<vmem>>, vector<1x8x128xf32>,
    return
  }
  func.func @transform_0(%arg0: i32, %arg1: i32, %arg2: i32, %arg3: i32) -> (i32, i32, i32) {
    %c0_i32 = arith.constant 0 : i32
    return %arg0, %arg1, %arg3 : i32, i32, i32
  }
  func.func @transform_1(%arg0: i32, %arg1: i32, %arg2: i32, %arg3: i32) -> (i32, i32, i32) {
    %c0_i32 = arith.constant 0 : i32
    return %arg0, %arg3, %arg2 : i32, i32, i32
  }
  func.func @transform_2(%arg0: i32, %arg1: i32, %arg2: i32, %arg3: i32) -> (i32, i32, i32) {
    %c0_i32 = arith.constant 0 : i32
    %c0_i32_0 = arith.constant 0 : i32
    return %arg0, %c0_i32, %arg2 : i32, i32, i32
  }
  func.func @transform_3(%arg0: i32, %arg1: i32, %arg2: i32, %arg3: i32) -> (i32, i32, i32) {
    %c0_i32 = arith.constant 0 : i32
    return %arg0, %arg1, %arg2 : i32, i32, i32
  }
}

</mosaic_0001>

<llo_original>
// kernel: tpu_custom_call.1
$region0: #{tpu_custom_call.1}
  #allocation0 [shape = 'u32[]', space=smem, size = 0x4, offset = 0x4, fixed_abs, tag = 'smem constant byte address 0x4 - core index']
  #allocation1 [shape = 'u32[144,128]{1,0:T(1,128)}', space=vmem, size = 0x12000, scoped, tag = 'internal scratch']
  %s0 = inlined_call_operand.hbm [shape: f32[1,8,256], index: 0, kind: input, shape index: {}]
  %s1 = inlined_call_operand.hbm [shape: f32[1,256,128], index: 1, kind: input, shape index: {}]
  %s2 = inlined_call_operand.vmem [shape: f32[1,1,128], index: 2, kind: input, shape index: {}]
  %s3 = inlined_call_operand.hbm [shape: f32[1,8,128], index: 3, kind: output, shape index: {}]
  %s4 = sld [smem:[#allocation0]]
  $region34: #{tpu_custom_call.1} parent=0
    _
  %s6 = ssub.s32 1, %s4
  %s7 = scalar_select 0, %s6, %s4
  $region1: #{tpu_custom_call.1} parent=0
    #allocation2 [shape = 'u8[8192]{0}', space=vmem, size = 0x2000, scoped, tag = 'input window, operand 0, single buffered']
    #allocation3 [shape = 's32[1]{0}', space=sflag, size = 0x4, scoped, tag = 'scoped memory for tpu_custom_call.1']
    #allocation4 [shape = 's32[1]{0}', space=sflag, size = 0x4, scoped, tag = 'scoped memory for tpu_custom_call.1']
    #allocation5 [shape = 'u8[131072]{0}', space=vmem, size = 0x20000, scoped, tag = 'input window, operand 1, single buffered']
    #allocation6 [shape = 's32[1]{0}', space=sflag, size = 0x4, scoped, tag = 'scoped memory for tpu_custom_call.1']
    #allocation7 [shape = 'u8[4096]{0}', space=vmem, size = 0x1000, scoped, tag = 'output window, operand 0, single buffered']
    %8 = vsyncpa [#allocation3], 0
    %9 = vsyncpa [#allocation6], 0
    %10 = vsyncpa [#allocation4], 0
    // Predicated region
    $region2: #{tpu_custom_call.1} parent=1 // pred_check
      _
    $region3: #{tpu_custom_call.1} parent=1 // pred_check_branch
      %12 = sbr.rel (0) target = $region5
    $region4: #{tpu_custom_call.1} parent=1 // pred_region
      %s14 = ssub.s32 256, 256
      %15 = vsyncadd [#allocation3], %s14
      %s17 = sshll.u32 [#allocation2], 4
      %s18 = int_to_ptr.vmem [resolvable:$true] %s17
      %20 = dma.hbm_to_vmem [thread:$0]  %s0, 256, %s18, [#allocation3]
    $region5: #{tpu_custom_call.1} parent=1 // pred_fallthru
      _
    // Predicated region
    $region6: #{tpu_custom_call.1} parent=1 // pred_check
      _
    $region7: #{tpu_custom_call.1} parent=1 // pred_check_branch
      %22 = sbr.rel (0) target = $region9
    $region8: #{tpu_custom_call.1} parent=1 // pred_region
      %s24 = ssub.s32 4096, 4096
      %25 = vsyncadd [#allocation6], %s24
      %s26 = sshll.u32 [#allocation5], 4
      %s27 = int_to_ptr.vmem [resolvable:$true] %s26
      %32 = dma.hbm_to_vmem [thread:$0]  %s1, 4096, %s27, [#allocation6], 128, 128, 8
    $region9: #{tpu_custom_call.1} parent=1 // pred_fallthru
      _
    // Predicated region
    $region10: #{tpu_custom_call.1} parent=1 // pred_check
      _
    $region11: #{tpu_custom_call.1} parent=1 // pred_check_branch
      %34 = sbr.rel (0) target = $region13
    $region12: #{tpu_custom_call.1} parent=1 // pred_region
      _
    $region13: #{tpu_custom_call.1} parent=1 // pred_fallthru
      _
    // Predicated region
    $region14: #{tpu_custom_call.1} parent=1 // pred_check
      _
    $region15: #{tpu_custom_call.1} parent=1 // pred_check_branch
      %36 = sbr.rel (0) target = $region17
    $region16: #{tpu_custom_call.1} parent=1 // pred_region
      %37 = dma.done [#allocation3], 256
    $region17: #{tpu_custom_call.1} parent=1 // pred_fallthru
      _
    // Predicated region
    $region18: #{tpu_custom_call.1} parent=1 // pred_check
      _
    $region19: #{tpu_custom_call.1} parent=1 // pred_check_branch
      %39 = sbr.rel (0) target = $region21
    $region20: #{tpu_custom_call.1} parent=1 // pred_region
      %40 = dma.done [#allocation6], 4096
    $region21: #{tpu_custom_call.1} parent=1 // pred_fallthru
      _
    %p41 = scmp.eq.s32.totalorder 0, 0
    // Predicated region
    $region22: #{tpu_custom_call.1} parent=1 // pred_check
      %p42 = pneg %p41
    $region23: #{tpu_custom_call.1} parent=1 // pred_check_branch
      %44 = sbr.rel (%p42) target = $region25
    $region24: #{tpu_custom_call.1} parent=1 // pred_region
      %v45 = vld [vmem:[%s2] sm:$0x1]
      %v47 = vlaneseq
      %v48 = vshrl.u32 %v47, 7
      %v49 = vsub.s32 0, %v48
      %v50 = vrot.slane %v45, %v49
      %v52 = vadd.f32 %v50, 0.0
      %53 = vst [vmem:[#allocation7] sm:$0xff] %v52
    $region25: #{tpu_custom_call.1} parent=1 // pred_fallthru
      _
    %v54 = vld [vmem:[#allocation7] sm:$0xff]
    %v55 = vld [vmem:[#allocation2] sm:$0xff]
    %v56 = vld [vmem:[#allocation2 + $0x8] sm:$0xff]
    %v57 = vld [vmem:[#allocation5] sm:$0xff]
    %v58 = vld [vmem:[#allocation5 + $0x8] sm:$0xff]
    %v59 = vld [vmem:[#allocation5 + $0x10] sm:$0xff]
    %v60 = vld [vmem:[#allocation5 + $0x18] sm:$0xff]
    %v61 = vld [vmem:[#allocation5 + $0x20] sm:$0xff]
    %v62 = vld [vmem:[#allocation5 + $0x28] sm:$0xff]
    %v63 = vld [vmem:[#allocation5 + $0x30] sm:$0xff]
    %v64 = vld [vmem:[#allocation5 + $0x38] sm:$0xff]
    %v65 = vld [vmem:[#allocation5 + $0x40] sm:$0xff]
    %v66 = vld [vmem:[#allocation5 + $0x48] sm:$0xff]
    %v67 = vld [vmem:[#allocation5 + $0x50] sm:$0xff]
    %v68 = vld [vmem:[#allocation5 + $0x58] sm:$0xff]
    %v69 = vld [vmem:[#allocation5 + $0x60] sm:$0xff]
    %v70 = vld [vmem:[#allocation5 + $0x68] sm:$0xff]
    %v71 = vld [vmem:[#allocation5 + $0x70] sm:$0xff]
    %v72 = vld [vmem:[#allocation5 + $0x78] sm:$0xff]
    %v73 = vld [vmem:[#allocation5 + $0x80] sm:$0xff]
    %v74 = vld [vmem:[#allocation5 + $0x88] sm:$0xff]
    %v75 = vld [vmem:[#allocation5 + $0x90] sm:$0xff]
    %v76 = vld [vmem:[#allocation5 + $0x98] sm:$0xff]
    %v77 = vld [vmem:[#allocation5 + $0xa0] sm:$0xff]
    %v78 = vld [vmem:[#allocation5 + $0xa8] sm:$0xff]
    %v79 = vld [vmem:[#allocation5 + $0xb0] sm:$0xff]
    %v80 = vld [vmem:[#allocation5 + $0xb8] sm:$0xff]
    %v81 = vld [vmem:[#allocation5 + $0xc0] sm:$0xff]
    %v82 = vld [vmem:[#allocation5 + $0xc8] sm:$0xff]
    %v83 = vld [vmem:[#allocation5 + $0xd0] sm:$0xff]
    %v84 = vld [vmem:[#allocation5 + $0xd8] sm:$0xff]
    %v85 = vld [vmem:[#allocation5 + $0xe0] sm:$0xff]
    %v86 = vld [vmem:[#allocation5 + $0xe8] sm:$0xff]
    %v87 = vld [vmem:[#allocation5 + $0xf0] sm:$0xff]
    %v88 = vld [vmem:[#allocation5 + $0xf8] sm:$0xff]
    %89 = vmatprep.subr.mxu0 0.0
    %90 = vmatpush1.msra.mxu0 %v72
    %91 = vmatprep.subr.mxu0 0.0
    %92 = vmatpush1.msra.mxu0 %v71
    %93 = vmatprep.subr.mxu0 0.0
    %94 = vmatpush1.msra.mxu0 %v70
    %95 = vmatprep.subr.mxu0 0.0
    %96 = vmatpush1.msra.mxu0 %v69
    %97 = vmatprep.subr.mxu0 0.0
    %98 = vmatpush1.msra.mxu0 %v68
    %99 = vmatprep.subr.mxu0 0.0
    %100 = vmatpush1.msra.mxu0 %v67
    %101 = vmatprep.subr.mxu0 0.0
    %102 = vmatpush1.msra.mxu0 %v66
    %103 = vmatprep.subr.mxu0 0.0
    %104 = vmatpush1.msra.mxu0 %v65
    %105 = vmatprep.subr.mxu0 0.0
    %106 = vmatpush1.msra.mxu0 %v64
    %107 = vmatprep.subr.mxu0 0.0
    %108 = vmatpush1.msra.mxu0 %v63
    %109 = vmatprep.subr.mxu0 0.0
    %110 = vmatpush1.msra.mxu0 %v62
    %111 = vmatprep.subr.mxu0 0.0
    %112 = vmatpush1.msra.mxu0 %v61
    %113 = vmatprep.subr.mxu0 0.0
    %114 = vmatpush1.msra.mxu0 %v60
    %115 = vmatprep.subr.mxu0 0.0
    %116 = vmatpush1.msra.mxu0 %v59
    %117 = vmatprep.subr.mxu0 0.0
    %118 = vmatpush1.msra.mxu0 %v58
    %119 = vmatprep.subr.mxu0 0.0
    %120 = vmatpush1.msra.mxu0 %v57
    %121 = vmatprep.subr.mxu0 0.0
    %122 = vmatpush2.msra.mxu0 %v88
    %123 = vmatprep.subr.mxu0 0.0
    %124 = vmatpush2.msra.mxu0 %v87
    %125 = vmatprep.subr.mxu0 0.0
    %126 = vmatpush2.msra.mxu0 %v86
    %127 = vmatprep.subr.mxu0 0.0
    %128 = vmatpush2.msra.mxu0 %v85
    %129 = vmatprep.subr.mxu0 0.0
    %130 = vmatpush2.msra.mxu0 %v84
    %131 = vmatprep.subr.mxu0 0.0
    %132 = vmatpush2.msra.mxu0 %v83
    %133 = vmatprep.subr.mxu0 0.0
    %134 = vmatpush2.msra.mxu0 %v82
    %135 = vmatprep.subr.mxu0 0.0
    %136 = vmatpush2.msra.mxu0 %v81
    %137 = vmatprep.subr.mxu0 0.0
    %138 = vmatpush2.msra.mxu0 %v80
    %139 = vmatprep.subr.mxu0 0.0
    %140 = vmatpush2.msra.mxu0 %v79
    %141 = vmatprep.subr.mxu0 0.0
    %142 = vmatpush2.msra.mxu0 %v78
    %143 = vmatprep.subr.mxu0 0.0
    %144 = vmatpush2.msra.mxu0 %v77
    %145 = vmatprep.subr.mxu0 0.0
    %146 = vmatpush2.msra.mxu0 %v76
    %147 = vmatprep.subr.mxu0 0.0
    %148 = vmatpush2.msra.mxu0 %v75
    %149 = vmatprep.subr.mxu0 0.0
    %150 = vmatpush2.msra.mxu0 %v74
    %151 = vmatprep.subr.mxu0 0.0
    %152 = vmatpush2.msra.mxu0 %v73
    %153 = vmatprep.mubr.f32.mxu0 %v56
    %154 = vmatmul.mubr.f32.gmra.mxu0 %v55
    %v155 = vpop.f32.mrf.mxu0
    %v156 = vadd.f32 0.0, %v155
    %v157 = vpop.f32.mrf.mxu0
    %158 = vdwg.mxu0
    %v159 = vadd.f32 %v54, %v156
    %160 = vst [vmem:[#allocation7] sm:$0xff] %v159
    // Predicated region
    $region26: #{tpu_custom_call.1} parent=1 // pred_check
      _
    $region27: #{tpu_custom_call.1} parent=1 // pred_check_branch
      %162 = sbr.rel (0) target = $region29
    $region28: #{tpu_custom_call.1} parent=1 // pred_region
      %s164 = ssub.s32 128, 128
      %165 = vsyncadd [#allocation4], %s164
      %s167 = sshll.u32 [#allocation7], 4
      %s168 = int_to_ptr.vmem [resolvable:$true] %s167
      %170 = dma.vmem_to_hbm [thread:$0]  %s168, 128, %s3, [#allocation4]
    $region29: #{tpu_custom_call.1} parent=1 // pred_fallthru
      _
    // Predicated region
    $region30: #{tpu_custom_call.1} parent=1 // pred_check
      _
    $region31: #{tpu_custom_call.1} parent=1 // pred_check_branch
      %172 = sbr.rel (0) target = $region33
    $region32: #{tpu_custom_call.1} parent=1 // pred_region
      %173 = dma.done [#allocation4], 128
    $region33: #{tpu_custom_call.1} parent=1 // pred_fallthru
      _
    %174 = vsyncpa [#allocation3], 1
    %175 = vsyncpa [#allocation6], 1
    %176 = vsyncpa [#allocation4], 1

</llo_original>
